<compile_context>
chip_gen: v5e
topology: v5e:2x2
jax: 0.10.0
libtpu: 0.0.40
codegen_flags: <defaults>
</compile_context>

<pallas_src>
import math

import jax
import jax.numpy as jnp
from jax import lax
from jax.experimental import pallas as pl
from jax.experimental.pallas import tpu as pltpu

_EPS = 1e-5
_SLOPE = 0.01  # nn.LeakyReLU default negative slope


# ----------------------------------------------------------------------------
# helpers
# ----------------------------------------------------------------------------
def _pick_tile(n, cap, quantum):
    """Largest divisor of n that is a multiple of `quantum` and <= cap, else n."""
    for t in range(min(cap, n), 0, -1):
        if n % t == 0 and t % quantum == 0:
            return t
    return n


# ----------------------------------------------------------------------------
# Kernel 1: fused pairwise (reduced) distances + top-k neighbour selection.
#   d[n, m] = ||x_m||^2 - 2 <x_n, x_m>   (row-constant ||x_n||^2 dropped; does
#   not change per-row ordering).  The [TM, N] distance block stays in VMEM;
#   only [TM, k] int32 indices are written to HBM.
# ----------------------------------------------------------------------------
def _make_knn_kernel(k, tm):
    def kernel(x_ref, sq_ref, idx_ref):
        base = pl.multiple_of(pl.program_id(1) * tm, tm)
        rows = x_ref[pl.ds(base, tm), :]                        # [tm, Fin]
        inner = lax.dot_general(rows, x_ref[...], (((1,), (1,)), ((), ())),
                                preferred_element_type=jnp.float32)
        d = sq_ref[...] - 2.0 * inner                           # [tm, N]
        n_cols = d.shape[1]
        col = lax.broadcasted_iota(jnp.int32, d.shape, 1)
        row = lax.broadcasted_iota(jnp.int32, d.shape, 0) + base
        d = jnp.where(col == row, jnp.inf, d)                   # drop self
        colf = col.astype(jnp.float32)
        for t in range(k):                                      # iterative argmin
            mval = jnp.min(d, axis=1, keepdims=True)
            cand = jnp.where(d <= mval, colf, float(n_cols))
            midx = jnp.min(cand, axis=1, keepdims=True).astype(jnp.int32)
            idx_ref[:, pl.ds(t, 1)] = midx
            d = jnp.where(col == midx, jnp.inf, d)
    return kernel


def knn_topk(x_nf, k, tile_rows=None):
    """x_nf: [B, N, F] -> k nearest-neighbour indices [B, N, k] (self excluded)."""
    B, N, F = x_nf.shape
    tm = tile_rows or _pick_tile(N, 256, 8)
    sq = jnp.sum(x_nf * x_nf, axis=2)[:, None, :]               # [B, 1, N]
    return pl.pallas_call(
        _make_knn_kernel(k, tm),
        out_shape=jax.ShapeDtypeStruct((B, N, k), jnp.int32),
        grid=(B, N // tm),
        in_specs=[pl.BlockSpec((None, N, F), lambda b, i: (b, 0, 0)),
                  pl.BlockSpec((None, 1, N), lambda b, i: (b, 0, 0))],
        out_specs=pl.BlockSpec((None, tm, k), lambda b, i: (b, i, 0)),
        compiler_params=pltpu.CompilerParams(
            dimension_semantics=("parallel", "parallel")),
    )(x_nf, sq)


# ----------------------------------------------------------------------------
# Kernel 2: fully fused bilateral edge-conv pipeline with in-kernel gather.
# ----------------------------------------------------------------------------
def _make_fused_kernel(K, KH, KO, Fin, TN, use_softmax, compute_dtype):
    C3 = Fin + 3
    F2 = 2 * Fin
    F4 = 4 * Fin

    def cast(a):
        return a if compute_dtype is None else a.astype(compute_dtype)

    def mm(a, w):
        return jnp.dot(cast(a), cast(w), preferred_element_type=jnp.float32)

    def bmm(a, w):   # k-batched matmul, f32 accumulation
        return jnp.einsum("ktf,kfo->kto", cast(a), cast(w),
                          preferred_element_type=jnp.float32)

    def lrelu(v):
        return jnp.where(v > 0, v, _SLOPE * v)

    def kernel(idx_ref, feat_ref,
               wc_ref, wd_ref, bfx_ref,
               wa1_ref, ba1_ref, wa2_ref, ba2_ref,
               wic_ref, bic_ref, wid_ref,
               w2a_ref, w2b_ref, w2i_ref, b2_ref,
               o_ref, nb_scr):
        b = pl.program_id(0)
        base = pl.multiple_of(pl.program_id(1) * TN, TN)

        # ---- in-kernel neighbour gather (per-batch point cloud is VMEM-resident)
        def gather(n, carry):
            off = (base + n) * K
            for t in range(K):
                j = idx_ref[b, off + t]
                nb_scr[t, pl.ds(n, 1), :] = feat_ref[pl.ds(j, 1), :]
            return carry
        lax.fori_loop(0, TN, gather, 0)

        ctr = feat_ref[pl.ds(base, TN), :]                      # [TN, Fin+3]
        dall = nb_scr[...] - ctr[None, :, :]                    # [K, TN, Fin+3]
        d2 = dall.reshape(K * TN, C3)
        df2 = d2[:, :Fin]                                       # [K*TN, Fin]
        ctr_f = ctr[:, :Fin]

        # ---- attention branch (conv_fea * conv_xyz -> conv_all), batched over k
        cpre = mm(ctr, wc_ref[...]) + bfx_ref[...]              # [TN, 32]
        dpre = mm(d2, wd_ref[...]).reshape(K, TN, 32)
        act = lrelu(dpre + cpre[None, :, :]).reshape(K * TN, 32)
        v = act[:, :16] * act[:, 16:]                           # w_fea * w_xyz
        v = lrelu(mm(v, wa1_ref[...]) + ba1_ref[...])           # [K*TN, 64]
        wk = lrelu(mm(v, wa2_ref[...]) + ba2_ref[...]).reshape(K, TN, F2)

        if use_softmax:                                         # softmax over k
            mx = jnp.max(wk, axis=0, keepdims=True)
            ex = jnp.exp(wk - mx)
            den = jnp.sum(ex, axis=0, keepdims=True)
            wk = ex * pl.reciprocal(den, approx=True)

        # ---- inte_conv_hk: width-KH conv over the k axis (even/odd split
        #      realizes the PyTorch interleave reshape)
        c_i = mm(ctr_f, wic_ref[...]) + bic_ref[...]            # [TN, 4Fin]
        df3 = df2.reshape(K, TN, Fin)
        acc = jnp.broadcast_to(c_i[None, :, :], (KO, TN, F4))
        for t in range(KH):
            contrib = mm(df3[t:t + KO].reshape(KO * TN, Fin), wid_ref[t])
            acc = acc + contrib.reshape(KO, TN, F4)
        inte = lrelu(acc)                                       # [KO, TN, 4Fin]
        inte_e = inte[:, :, :F2]                                # -> k slots 0..KO-1
        inte_o = inte[:, :, F2:]                                # -> k slots KO..K-1

        # ---- conv2 over the 2k window ([e_fea | inte*w]) + BN + ReLU ----------
        w2i = w2i_ref[...]
        y = mm(ctr_f, w2a_ref[...]) + b2_ref[...]               # [TN, 2Fout]
        y = y + jnp.sum(bmm(df3, w2b_ref[...]), axis=0)
        y = y + jnp.sum(bmm(inte_e * wk[:KO], w2i[:KO]), axis=0)
        y = y + jnp.sum(bmm(inte_o * wk[KO:], w2i[KO:]), axis=0)

        o_ref[...] = jnp.maximum(y, 0.0).T                      # [2Fout, TN]
    return kernel


_W_ORDER = ("wc", "wd", "bfx", "wa1", "ba1", "wa2", "ba2",
            "wic", "bic", "wid", "w2a", "w2b", "w2i", "b2")


def _fused_call(feat_all, idx_flat, params, k, Fout, use_softmax, tn,
                compute_dtype):
    B, N, C3 = feat_all.shape
    Fin = C3 - 3
    F2o = 2 * Fout
    KH = k // 2 + 1
    KO = k - KH + 1
    kernel = _make_fused_kernel(k, KH, KO, Fin, tn, use_softmax, compute_dtype)
    w_arrays = [params[n] for n in _W_ORDER]

    def _const_spec(a):
        nd = a.ndim
        return pl.BlockSpec(a.shape, lambda b, i, idx, _nd=nd: (0,) * _nd)

    grid_spec = pltpu.PrefetchScalarGridSpec(
        num_scalar_prefetch=1,                       # kNN indices -> SMEM
        grid=(B, N // tn),
        in_specs=[pl.BlockSpec((None, N, C3), lambda b, i, idx: (b, 0, 0))]
                 + [_const_spec(a) for a in w_arrays],
        out_specs=pl.BlockSpec((None, F2o, tn), lambda b, i, idx: (b, 0, i)),
        scratch_shapes=[pltpu.VMEM((k, tn, C3), jnp.float32)],
    )
    return pl.pallas_call(
        kernel,
        out_shape=jax.ShapeDtypeStruct((B, F2o, N), jnp.float32),
        grid_spec=grid_spec,
        compiler_params=pltpu.CompilerParams(
            dimension_semantics=("parallel", "parallel"),
            vmem_limit_bytes=64 * 1024 * 1024),
    )(idx_flat, feat_all, *w_arrays)


# ----------------------------------------------------------------------------
# Parameter containers / folding (eval-mode BatchNorm folded into conv)
# ----------------------------------------------------------------------------
def _conv_init(key, cout, cin, kw):
    k1, k2 = jax.random.split(key)
    bound = 1.0 / math.sqrt(cin * kw)
    w = jax.random.uniform(k1, (cout, cin, 1, kw), jnp.float32, -bound, bound)
    b = jax.random.uniform(k2, (cout,), jnp.float32, -bound, bound)
    return w, b


def _bn_init(key, c):
    k1, k2, k3, k4 = jax.random.split(key, 4)
    g = 1.0 + 0.1 * jax.random.normal(k1, (c,), jnp.float32)
    beta = 0.1 * jax.random.normal(k2, (c,), jnp.float32)
    rm = 0.1 * jax.random.normal(k3, (c,), jnp.float32)
    rv = jax.random.uniform(k4, (c,), jnp.float32, 0.5, 1.5)
    return g, beta, rm, rv


def _fold(w, b, g, beta, rm, rv):
    s = g / jnp.sqrt(rv + _EPS)
    return w * s[:, None, None, None], (b - rm) * s + beta


class BilateralUpsampleEdgeConv:
    """Pallas version of bilateral_upsample_edgeConv: ([B,Fin,N],[B,3,N]) -> [B,Fout,2N]."""

    def __init__(self, Fin, Fout, k, num=-1, softmax=True, key=None,
                 matmul_dtype=None):
        assert k % 2 == 0, "k must be even (PyTorch view(..., 2, k//2) requires it)"
        self.Fin, self.Fout, self.k, self.num, self.softmax = Fin, Fout, k, num, softmax
        self.matmul_dtype = matmul_dtype  # e.g. jnp.bfloat16 on v6e/v7x
        key = jax.random.PRNGKey(0) if key is None else key
        kk = jax.random.split(key, 12)
        self.w_cf, self.b_cf = _conv_init(kk[0], 16, 2 * Fin, 1)
        self.bn_cf = _bn_init(kk[1], 16)
        self.w_cx, self.b_cx = _conv_init(kk[2], 16, 6, 1)
        self.bn_cx = _bn_init(kk[3], 16)
        self.w_a1, self.b_a1 = _conv_init(kk[4], 64, 16, 1)
        self.bn_a1 = _bn_init(kk[5], 64)
        self.w_a2, self.b_a2 = _conv_init(kk[6], 2 * Fin, 64, 1)
        self.bn_a2 = _bn_init(kk[7], 2 * Fin)
        self.w_i, self.b_i = _conv_init(kk[8], 4 * Fin, 2 * Fin, k // 2 + 1)
        self.bn_i = _bn_init(kk[9], 4 * Fin)
        self.w_2, self.b_2 = _conv_init(kk[10], 2 * Fout, 2 * Fin, 2 * k)
        self.bn_2 = _bn_init(kk[11], 2 * Fout)

    # packed, BN-folded kernel parameters ----------------------------------
    def kernel_params(self):
        Fin, k = self.Fin, self.k
        wf, bf = _fold(self.w_cf, self.b_cf, *self.bn_cf)
        wx, bx = _fold(self.w_cx, self.b_cx, *self.bn_cx)
        wa1, ba1 = _fold(self.w_a1, self.b_a1, *self.bn_a1)
        wa2, ba2 = _fold(self.w_a2, self.b_a2, *self.bn_a2)
        wi, bi = _fold(self.w_i, self.b_i, *self.bn_i)
        w2, b2 = _fold(self.w_2, self.b_2, *self.bn_2)

        wf_t = wf[:, :, 0, 0].T                                  # [2Fin, 16]
        wx_t = wx[:, :, 0, 0].T                                  # [6, 16]
        zf = jnp.zeros((Fin, 16), jnp.float32)
        zx = jnp.zeros((3, 16), jnp.float32)
        # block-diagonal packing: cols 0:16 <- conv_fea, cols 16:32 <- conv_xyz
        wc = jnp.concatenate([jnp.concatenate([wf_t[:Fin], zf], axis=1),
                              jnp.concatenate([zx, wx_t[:3]], axis=1)], axis=0)
        wd = jnp.concatenate([jnp.concatenate([wf_t[Fin:], zf], axis=1),
                              jnp.concatenate([zx, wx_t[3:]], axis=1)], axis=0)
        bfx = jnp.concatenate([bf, bx])[None, :]                 # [1, 32]

        # inte_conv weights, output channels permuted to [evens | odds]
        perm = jnp.concatenate([jnp.arange(0, 4 * Fin, 2),
                                jnp.arange(1, 4 * Fin, 2)])
        wi_t = jnp.transpose(wi[:, :, 0, :], (2, 1, 0))[:, :, perm]  # [KH,2Fin,4Fin]
        bic = bi[perm][None, :]
        wic = jnp.sum(wi_t[:, :Fin, :], axis=0)                  # [Fin, 4Fin]
        wid = wi_t[:, Fin:, :]                                   # [KH, Fin, 4Fin]

        w2_t = jnp.transpose(w2[:, :, 0, :], (2, 1, 0))          # [2k, 2Fin, 2Fout]
        params = dict(
            wc=wc, wd=wd, bfx=bfx,
            wa1=wa1[:, :, 0, 0].T, ba1=ba1[None, :],
            wa2=wa2[:, :, 0, 0].T, ba2=ba2[None, :],
            wic=wic, bic=bic, wid=wid,
            w2a=jnp.sum(w2_t[:k, :Fin, :], axis=0),              # [Fin, 2Fout]
            w2b=w2_t[:k, Fin:, :],                               # [k, Fin, 2Fout]
            w2i=w2_t[k:],                                        # [k, 2Fin, 2Fout]
            b2=b2[None, :],
        )
        if self.matmul_dtype is not None:
            for n in ("wc", "wd", "wa1", "wa2", "wic", "wid", "w2a", "w2b", "w2i"):
                params[n] = params[n].astype(self.matmul_dtype)
        return params

    # kNN (fused Pallas distances + top-k) -----------------------------------
    def knn_idx(self, x_nf):
        return knn_topk(x_nf, self.k)                            # [B, N, k]

    # forward ----------------------------------------------------------------
    def __call__(self, x, pc):
        B, Fin, N = x.shape
        assert Fin == self.Fin and pc.shape == (B, 3, N)
        x_nf = jnp.transpose(x, (0, 2, 1))                       # [B, N, Fin]
        pc_nf = jnp.transpose(pc, (0, 2, 1))                     # [B, N, 3]
        feat_all = jnp.concatenate([x_nf, pc_nf], axis=-1)       # [B, N, Fin+3]

        idx = self.knn_idx(x_nf)                                 # [B, N, k]
        idx_flat = idx.reshape(B, N * self.k)                    # scalar-prefetch arg

        tn = _pick_tile(N, 128, 128)                             # lane-dense output
        out = _fused_call(feat_all, idx_flat, self.kernel_params(),
                          self.k, self.Fout, self.softmax, tn,
                          self.matmul_dtype)                     # [B, 2Fout, N]
        # [B, 2Fout, N] -> [B, Fout, 2N] is a pure reshape (matches PyTorch views)
        return out.reshape(B, self.Fout, 2 * N)


# ----------------------------------------------------------------------------
# Pure-JAX reference that follows the PyTorch ops literally (validation only).
# Takes the kNN indices as an argument so the check is independent of
# tie-breaking / matmul-precision details of the neighbour search.
# ----------------------------------------------------------------------------
def _reference_forward(x, pc, idx, mod):
    B, Fin, N = x.shape
    k, Fout = mod.k, mod.Fout
    hi = jax.lax.Precision.HIGHEST

    nb = jax.vmap(lambda xb, ib: xb[:, ib])(x, idx)              # [B, Fin, N, k]
    nbp = jax.vmap(lambda pb, ib: pb[:, ib])(pc, idx)            # [B, 3,  N, k]
    central = jnp.broadcast_to(x[:, :, :, None], nb.shape)
    central_p = jnp.broadcast_to(pc[:, :, :, None], nbp.shape)
    e_fea = jnp.concatenate([central, nb - central], axis=1)
    e_xyz = jnp.concatenate([central_p, nbp - central_p], axis=1)

    def bn4(y, g, b, rm, rv):
        s = g / jnp.sqrt(rv + _EPS)
        return (y - rm[None, :, None, None]) * s[None, :, None, None] \
            + b[None, :, None, None]

    def lrelu(y):
        return jnp.where(y > 0, y, _SLOPE * y)

    def conv1x1(v, w, b):
        return jnp.einsum("bcnk,oc->bonk", v, w[:, :, 0, 0], precision=hi) \
            + b[None, :, None, None]

    w_fea = lrelu(bn4(conv1x1(e_fea, mod.w_cf, mod.b_cf), *mod.bn_cf))
    w_xyz = lrelu(bn4(conv1x1(e_xyz, mod.w_cx, mod.b_cx), *mod.bn_cx))
    w = w_fea * w_xyz
    w = lrelu(bn4(conv1x1(w, mod.w_a1, mod.b_a1), *mod.bn_a1))
    w = lrelu(bn4(conv1x1(w, mod.w_a2, mod.b_a2), *mod.bn_a2))
    if mod.softmax:
        w = jax.nn.softmax(w, axis=-1)

    KH = k // 2 + 1
    KO = k - KH + 1
    taps = [jnp.einsum("bcnt,oct->bon", e_fea[:, :, :, j:j + KH],
                       mod.w_i[:, :, 0, :], precision=hi) for j in range(KO)]
    inte = jnp.stack(taps, axis=-1) + mod.b_i[None, :, None, None]
    inte = lrelu(bn4(inte, *mod.bn_i))
    inte = jnp.transpose(inte, (0, 2, 1, 3))
    inte = inte.reshape(B, N, 2 * Fin, 2, KO).reshape(B, N, 2 * Fin, k)
    inte = jnp.transpose(inte, (0, 2, 1, 3))
    inte = inte * w

    merge = jnp.concatenate([e_fea, inte], axis=3)
    y = jnp.einsum("bcnt,oct->bon", merge, mod.w_2[:, :, 0, :], precision=hi) \
        + mod.b_2[None, :, None]
    g2, be2, rm2, rv2 = mod.bn_2
    y = (y - rm2[None, :, None]) * (g2 / jnp.sqrt(rv2 + _EPS))[None, :, None] \
        + be2[None, :, None]
    y = jnp.maximum(y, 0.0)
    return y.reshape(B, Fout, 2, N).reshape(B, Fout, 2 * N)


# ----------------------------------------------------------------------------
if __name__ == "__main__":
    B, Fin, N, K, Fout = 2, 4, 16, 4, 8
    key = jax.random.PRNGKey(0)
    kx, kp, kw = jax.random.split(key, 3)
    x = jax.random.normal(kx, (B, Fin, N), jnp.float32)
    pc = jax.random.normal(kp, (B, 3, N), jnp.float32)

    mod = BilateralUpsampleEdgeConv(Fin, Fout, K, num=-1, softmax=True, key=kw)

    y = jax.block_until_ready(mod(x, pc))
    assert y.shape == (B, Fout, 2 * N)

    x_nf = jnp.transpose(x, (0, 2, 1))
    idx = jax.block_until_ready(mod.knn_idx(x_nf))               # [B, N, K]

    # 1) neighbour-selection sanity (tie-robust): selected distances must match
    #    the k smallest exact distances per row, and self must be excluded.
    hi = jax.lax.Precision.HIGHEST
    xs = jnp.sum(x_nf ** 2, axis=2)
    d_exact = xs[:, :, None] + xs[:, None, :] - 2.0 * jnp.einsum(
        "bnf,bmf->bnm", x_nf, x_nf, precision=hi)
    d_masked = jnp.where(jnp.eye(N, dtype=bool)[None], jnp.inf, d_exact)
    ref_vals = jnp.sort(-lax.top_k(-d_masked, K)[0], axis=-1)
    got_vals = jnp.sort(jnp.take_along_axis(d_masked, idx, axis=2), axis=-1)
    assert bool(jnp.all(idx >= 0)) and bool(jnp.all(idx < N))
    assert bool(jnp.all(idx != jnp.arange(N)[None, :, None]))
    assert jnp.allclose(got_vals, ref_vals, atol=1e-3, rtol=1e-3)

    # 2) validate the fused pipeline end-to-end against the literal JAX port
    y_ref = _reference_forward(x, pc, idx, mod)
    assert jnp.allclose(y, y_ref, atol=5e-2, rtol=5e-2)

    print("KERNEL_OK")
</pallas_src>

<mosaic_0001>
module attributes {stable_mosaic.version = 11 : i64} {
  func.func @kernel(%arg0: i32, %arg1: i32, %arg2: memref<1x16x4xf32, #tpu.memory_space<vmem>>, %arg3: memref<1x1x16xf32, #tpu.memory_space<vmem>>, %arg4: memref<1x16x4xi32, #tpu.memory_space<vmem>>) attributes {dimension_semantics = [#tpu.dimension_semantics<parallel>, #tpu.dimension_semantics<parallel>], iteration_bounds = array<i64: 2, 1>, scalar_prefetch = 0 : i64, scratch_operands = 0 : i64, tpu.core_type = #tpu.core_type<tc>, window_params = [{transform_indices = @transform_0, window_bounds = array<i64: 1, 16, 4>}, {transform_indices = @transform_1, window_bounds = array<i64: 1, 1, 16>}, {transform_indices = @transform_2, window_bounds = array<i64: 1, 16, 4>}]} {
    %c16_i32 = arith.constant 16 : i32
    %0 = arith.muli %arg1, %c16_i32 : i32
    %1 = tpu.assume_multiple %0, 16 : i32
    %c0 = arith.constant 0 : index
    %2 = arith.index_cast %1 : i32 to index
    %c0_0 = arith.constant 0 : index
    %3 = vector.load %arg2[%c0, %2, %c0_0] : memref<1x16x4xf32, #tpu.memory_space<vmem>>, vector<1x16x4xf32>
    %4 = vector.shape_cast %3 : vector<1x16x4xf32> to vector<16x4xf32>
    %c0_1 = arith.constant 0 : index
    %c0_2 = arith.constant 0 : index
    %c0_3 = arith.constant 0 : index
    %5 = vector.load %arg2[%c0_1, %c0_2, %c0_3] : memref<1x16x4xf32, #tpu.memory_space<vmem>>, vector<1x16x4xf32>
    %6 = vector.shape_cast %5 : vector<1x16x4xf32> to vector<16x4xf32>
    %cst = arith.constant dense<0.000000e+00> : vector<16x16xf32>
    %7 = tpu.matmul %4, %6, %cst {dimension_numbers = #tpu.dot_dimension_numbers<[1], [1], [0], [0], [0, 0, 1, 0], [], []>} : vector<16x4xf32>, vector<16x4xf32>, vector<16x16xf32> -> vector<16x16xf32>
    %c0_4 = arith.constant 0 : index
    %c0_5 = arith.constant 0 : index
    %c0_6 = arith.constant 0 : index
    %8 = vector.load %arg3[%c0_4, %c0_5, %c0_6] : memref<1x1x16xf32, #tpu.memory_space<vmem>>, vector<1x1x16xf32>
    %9 = vector.shape_cast %8 : vector<1x1x16xf32> to vector<1x16xf32>
    %cst_7 = arith.constant 2.000000e+00 : f32
    %10 = vector.broadcast %cst_7 : f32 to vector<16x16xf32>
    %11 = arith.mulf %10, %7 : vector<16x16xf32>
    %12 = vector.broadcast %9 : vector<1x16xf32> to vector<16x16xf32>
    %13 = arith.subf %12, %11 : vector<16x16xf32>
    %14 = tpu.iota {dimensions = array<i32: 1>} : vector<16x16xi32>
    %15 = tpu.iota {dimensions = array<i32: 0>} : vector<16x16xi32>
    %16 = vector.broadcast %1 : i32 to vector<16x16xi32>
    %17 = arith.addi %15, %16 : vector<16x16xi32>
    %18 = arith.cmpi eq, %14, %17 : vector<16x16xi32>
    %cst_8 = arith.constant 0x7F800000 : f32
    %19 = vector.broadcast %cst_8 : f32 to vector<16x16xf32>
    %20 = arith.select %18, %19, %13 : vector<16x16xi1>, vector<16x16xf32>
    %21 = arith.sitofp %14 : vector<16x16xi32> to vector<16x16xf32>
    %cst_9 = arith.constant dense<0x7F800000> : vector<16xf32>
    %22 = vector.multi_reduction <minimumf>, %20, %cst_9 [1] : vector<16x16xf32> to vector<16xf32>
    %23 = vector.shape_cast %22 : vector<16xf32> to vector<16x1xf32>
    %24 = vector.broadcast %23 : vector<16x1xf32> to vector<16x16xf32>
    %25 = arith.cmpf ole, %20, %24 : vector<16x16xf32>
    %cst_10 = arith.constant 1.600000e+01 : f32
    %26 = vector.broadcast %cst_10 : f32 to vector<16x16xf32>
    %27 = arith.select %25, %21, %26 : vector<16x16xi1>, vector<16x16xf32>
    %cst_11 = arith.constant dense<0x7F800000> : vector<16xf32>
    %28 = vector.multi_reduction <minimumf>, %27, %cst_11 [1] : vector<16x16xf32> to vector<16xf32>
    %29 = vector.shape_cast %28 : vector<16xf32> to vector<16x1xf32>
    %30 = arith.fptosi %29 : vector<16x1xf32> to vector<16x1xi32>
    %c0_12 = arith.constant 0 : index
    %c0_13 = arith.constant 0 : index
    %c0_14 = arith.constant 0 : index
    %31 = vector.load %arg4[%c0_12, %c0_13, %c0_14] : memref<1x16x4xi32, #tpu.memory_space<vmem>>, vector<1x16x1xi32>
    %32 = vector.shape_cast %31 : vector<1x16x1xi32> to vector<16x1xi32>
    %33 = vector.shape_cast %30 : vector<16x1xi32> to vector<1x16x1xi32>
    tpu.vector_store %arg4[%c0_12, %c0_13, %c0_14], %33 {strides = array<i32>} : memref<1x16x4xi32, #tpu.memory_space<vmem>>, vector<1x16x1xi32>,
    %34 = vector.broadcast %30 : vector<16x1xi32> to vector<16x16xi32>
    %35 = arith.cmpi eq, %14, %34 : vector<16x16xi32>
    %cst_15 = arith.constant 0x7F800000 : f32
    %36 = vector.broadcast %cst_15 : f32 to vector<16x16xf32>
    %37 = arith.select %35, %36, %20 : vector<16x16xi1>, vector<16x16xf32>
    %cst_16 = arith.constant dense<0x7F800000> : vector<16xf32>
    %38 = vector.multi_reduction <minimumf>, %37, %cst_16 [1] : vector<16x16xf32> to vector<16xf32>
    %39 = vector.shape_cast %38 : vector<16xf32> to vector<16x1xf32>
    %40 = vector.broadcast %39 : vector<16x1xf32> to vector<16x16xf32>
    %41 = arith.cmpf ole, %37, %40 : vector<16x16xf32>
    %cst_17 = arith.constant 1.600000e+01 : f32
    %42 = vector.broadcast %cst_17 : f32 to vector<16x16xf32>
    %43 = arith.select %41, %21, %42 : vector<16x16xi1>, vector<16x16xf32>
    %cst_18 = arith.constant dense<0x7F800000> : vector<16xf32>
    %44 = vector.multi_reduction <minimumf>, %43, %cst_18 [1] : vector<16x16xf32> to vector<16xf32>
    %45 = vector.shape_cast %44 : vector<16xf32> to vector<16x1xf32>
    %46 = arith.fptosi %45 : vector<16x1xf32> to vector<16x1xi32>
    %c0_19 = arith.constant 0 : index
    %c0_20 = arith.constant 0 : index
    %c1 = arith.constant 1 : index
    %47 = vector.load %arg4[%c0_19, %c0_20, %c1] : memref<1x16x4xi32, #tpu.memory_space<vmem>>, vector<1x16x1xi32>
    %48 = vector.shape_cast %47 : vector<1x16x1xi32> to vector<16x1xi32>
    %49 = vector.shape_cast %46 : vector<16x1xi32> to vector<1x16x1xi32>
    tpu.vector_store %arg4[%c0_19, %c0_20, %c1], %49 {strides = array<i32>} : memref<1x16x4xi32, #tpu.memory_space<vmem>>, vector<1x16x1xi32>,
    %50 = vector.broadcast %46 : vector<16x1xi32> to vector<16x16xi32>
    %51 = arith.cmpi eq, %14, %50 : vector<16x16xi32>
    %cst_21 = arith.constant 0x7F800000 : f32
    %52 = vector.broadcast %cst_21 : f32 to vector<16x16xf32>
    %53 = arith.select %51, %52, %37 : vector<16x16xi1>, vector<16x16xf32>
    %cst_22 = arith.constant dense<0x7F800000> : vector<16xf32>
    %54 = vector.multi_reduction <minimumf>, %53, %cst_22 [1] : vector<16x16xf32> to vector<16xf32>
    %55 = vector.shape_cast %54 : vector<16xf32> to vector<16x1xf32>
    %56 = vector.broadcast %55 : vector<16x1xf32> to vector<16x16xf32>
    %57 = arith.cmpf ole, %53, %56 : vector<16x16xf32>
    %cst_23 = arith.constant 1.600000e+01 : f32
    %58 = vector.broadcast %cst_23 : f32 to vector<16x16xf32>
    %59 = arith.select %57, %21, %58 : vector<16x16xi1>, vector<16x16xf32>
    %cst_24 = arith.constant dense<0x7F800000> : vector<16xf32>
    %60 = vector.multi_reduction <minimumf>, %59, %cst_24 [1] : vector<16x16xf32> to vector<16xf32>
    %61 = vector.shape_cast %60 : vector<16xf32> to vector<16x1xf32>
    %62 = arith.fptosi %61 : vector<16x1xf32> to vector<16x1xi32>
    %c0_25 = arith.constant 0 : index
    %c0_26 = arith.constant 0 : index
    %c2 = arith.constant 2 : index
    %63 = vector.load %arg4[%c0_25, %c0_26, %c2] : memref<1x16x4xi32, #tpu.memory_space<vmem>>, vector<1x16x1xi32>
    %64 = vector.shape_cast %63 : vector<1x16x1xi32> to vector<16x1xi32>
    %65 = vector.shape_cast %62 : vector<16x1xi32> to vector<1x16x1xi32>
    tpu.vector_store %arg4[%c0_25, %c0_26, %c2], %65 {strides = array<i32>} : memref<1x16x4xi32, #tpu.memory_space<vmem>>, vector<1x16x1xi32>,
    %66 = vector.broadcast %62 : vector<16x1xi32> to vector<16x16xi32>
    %67 = arith.cmpi eq, %14, %66 : vector<16x16xi32>
    %cst_27 = arith.constant 0x7F800000 : f32
    %68 = vector.broadcast %cst_27 : f32 to vector<16x16xf32>
    %69 = arith.select %67, %68, %53 : vector<16x16xi1>, vector<16x16xf32>
    %cst_28 = arith.constant dense<0x7F800000> : vector<16xf32>
    %70 = vector.multi_reduction <minimumf>, %69, %cst_28 [1] : vector<16x16xf32> to vector<16xf32>
    %71 = vector.shape_cast %70 : vector<16xf32> to vector<16x1xf32>
    %72 = vector.broadcast %71 : vector<16x1xf32> to vector<16x16xf32>
    %73 = arith.cmpf ole, %69, %72 : vector<16x16xf32>
    %cst_29 = arith.constant 1.600000e+01 : f32
    %74 = vector.broadcast %cst_29 : f32 to vector<16x16xf32>
    %75 = arith.select %73, %21, %74 : vector<16x16xi1>, vector<16x16xf32>
    %cst_30 = arith.constant dense<0x7F800000> : vector<16xf32>
    %76 = vector.multi_reduction <minimumf>, %75, %cst_30 [1] : vector<16x16xf32> to vector<16xf32>
    %77 = vector.shape_cast %76 : vector<16xf32> to vector<16x1xf32>
    %78 = arith.fptosi %77 : vector<16x1xf32> to vector<16x1xi32>
    %c0_31 = arith.constant 0 : index
    %c0_32 = arith.constant 0 : index
    %c3 = arith.constant 3 : index
    %79 = vector.load %arg4[%c0_31, %c0_32, %c3] : memref<1x16x4xi32, #tpu.memory_space<vmem>>, vector<1x16x1xi32>
    %80 = vector.shape_cast %79 : vector<1x16x1xi32> to vector<16x1xi32>
    %81 = vector.shape_cast %78 : vector<16x1xi32> to vector<1x16x1xi32>
    tpu.vector_store %arg4[%c0_31, %c0_32, %c3], %81 {strides = array<i32>} : memref<1x16x4xi32, #tpu.memory_space<vmem>>, vector<1x16x1xi32>,
    return
  }
  func.func @transform_0(%arg0: i32, %arg1: i32) -> (i32, i32, i32) {
    %c0_i32 = arith.constant 0 : i32
    %c0_i32_0 = arith.constant 0 : i32
    %c0_i32_1 = arith.constant 0 : i32
    return %arg0, %c0_i32, %c0_i32_0 : i32, i32, i32
  }
  func.func @transform_1(%arg0: i32, %arg1: i32) -> (i32, i32, i32) {
    %c0_i32 = arith.constant 0 : i32
    %c0_i32_0 = arith.constant 0 : i32
    %c0_i32_1 = arith.constant 0 : i32
    return %arg0, %c0_i32, %c0_i32_0 : i32, i32, i32
  }
  func.func @transform_2(%arg0: i32, %arg1: i32) -> (i32, i32, i32) {
    %c0_i32 = arith.constant 0 : i32
    %c0_i32_0 = arith.constant 0 : i32
    return %arg0, %arg1, %c0_i32 : i32, i32, i32
  }
}

</mosaic_0001>

<llo_original>
// kernel: tpu_custom_call.1
$region0: #{tpu_custom_call.1}
  #allocation0 [shape = 'u32[]', space=smem, size = 0x4, offset = 0x4, fixed_abs, tag = 'smem constant byte address 0x4 - core index']
  #allocation1 [shape = 'u32[72,128]{1,0:T(1,128)}', space=vmem, size = 0x9000, scoped, tag = 'internal scratch']
  %s0 = inlined_call_operand.vmem [shape: f32[2,16,4], index: 0, kind: input, shape index: {}]
  %s1 = inlined_call_operand.vmem [shape: f32[2,1,16], index: 1, kind: input, shape index: {}]
  %s2 = inlined_call_operand.vmem [shape: s32[2,16,4], index: 2, kind: output, shape index: {}]
  %s3 = sld [smem:[#allocation0]]
  $region41: #{tpu_custom_call.1} parent=0
    _
  %s5 = ssub.s32 1, %s3
  %s6 = scalar_select 0, %s5, %s3
  loop: start=0, step=1, limit=4
  $region2: #{tpu_custom_call.1} parent=0 // loop_pre_header
    _
  $region3: #{tpu_custom_call.1} parent=0 // loop_header
    %s8 = sphi 0, %s12
    %p9 = scmp.ge.s32.totalorder %s8, 4
    %s15 = sphi 0, %s27
    %s16 = sphi 0, %s23
    %s17 = sphi 0, %s15
    %s18 = sphi 0, %s16
    %s19 = sphi 0, %s17
    %s20 = sphi 0, %s18
    %s30 = sphi 0, %s32
    %s33 = sphi 0, %s30
    %s34 = sphi 0, %s33
    %s50 = sphi 0, %s34
    %s56 = sphi 0, %s58
    %s59 = sphi 0, %s56
    %s60 = sphi 0, %s59
    %s76 = sphi 0, %s60
    %s84 = sphi 0, %s86
    %s87 = sphi 0, %s84
    %s88 = sphi 0, %s87
    %s104 = sphi 0, %s88
  $region4: #{tpu_custom_call.1} parent=0 // loop_header_branch
    %11 = sbr.rel (%p9) target = $region8
  $region5: #{tpu_custom_call.1} parent=0 // loop_body
    %s13 = ssub.s32 %s8, 1
    %s14 = ssub.s32 %s8, 2
    %s21 = sadd.s32 1, %s16
    %p22 = scmp.ge.s32.totalorder %s21, 1
    %s23 = scalar_select %p22, 0, %s21
    %s24 = sadd.s32 1, %s15
    %s25 = scalar_select %p22, %s24, %s15
    %p26 = scmp.ge.s32.totalorder %s25, 2
    %s27 = scalar_select %p26, 0, %s25
    %s28 = ssub.s32 %s15, %s27
    %p29 = scmp.eq.s32.totalorder %s28, 0
    %s31 = sadd.s32 %s30, 1
    %s32 = scalar_select %p29, %s30, %s31
    %p35 = pneg %p29
    %p36 = scmp.eq.s32.totalorder %s8, 1
    %p37 = por %p35, %p36
    %p38 = scmp.ne.s32.totalorder %s30, %s33
    %p39 = scmp.eq.s32.totalorder %s8, 0
    %p40 = por %p38, %p39
    %p41 = scmp.ne.s32.totalorder %s30, %s33
    %p42 = scmp.eq.s32.totalorder %s13, 1
    %p43 = por %p41, %p42
    %p44 = scmp.ne.s32.totalorder %s33, %s34
    %p45 = scmp.eq.s32.totalorder %s13, 0
    %p46 = por %p44, %p45
    %p47 = scmp.ne.s32.totalorder %s33, %s34
    %p48 = scmp.eq.s32.totalorder %s14, 1
    %p49 = por %p47, %p48
    %p51 = scmp.ne.s32.totalorder %s34, %s50
    %p52 = scmp.eq.s32.totalorder %s14, 0
    %p53 = por %p51, %p52
    %s54 = ssub.s32 %s15, %s27
    %p55 = scmp.eq.s32.totalorder %s54, 0
    %s57 = sadd.s32 %s56, 1
    %s58 = scalar_select %p55, %s56, %s57
    %p61 = pneg %p55
    %p62 = scmp.eq.s32.totalorder %s8, 1
    %p63 = por %p61, %p62
    %p64 = scmp.ne.s32.totalorder %s56, %s59
    %p65 = scmp.eq.s32.totalorder %s8, 0
    %p66 = por %p64, %p65
    %p67 = scmp.ne.s32.totalorder %s56, %s59
    %p68 = scmp.eq.s32.totalorder %s13, 1
    %p69 = por %p67, %p68
    %p70 = scmp.ne.s32.totalorder %s59, %s60
    %p71 = scmp.eq.s32.totalorder %s13, 0
    %p72 = por %p70, %p71
    %p73 = scmp.ne.s32.totalorder %s59, %s60
    %p74 = scmp.eq.s32.totalorder %s14, 1
    %p75 = por %p73, %p74
    %p77 = scmp.ne.s32.totalorder %s60, %s76
    %p78 = scmp.eq.s32.totalorder %s14, 0
    %p79 = por %p77, %p78
    %s80 = ssub.s32 %s15, %s27
    %s81 = ssub.s32 %s16, %s23
    %s82 = sor.u32 %s80, %s81
    %p83 = scmp.eq.s32.totalorder %s82, 0
    %s85 = sadd.s32 %s84, 1
    %s86 = scalar_select %p83, %s84, %s85
    %p89 = pneg %p83
    %p90 = scmp.eq.s32.totalorder %s8, 1
    %p91 = por %p89, %p90
    %p92 = scmp.ne.s32.totalorder %s84, %s87
    %p93 = scmp.eq.s32.totalorder %s8, 0
    %p94 = por %p92, %p93
    %p95 = scmp.ne.s32.totalorder %s84, %s87
    %p96 = scmp.eq.s32.totalorder %s13, 1
    %p97 = por %p95, %p96
    %p98 = scmp.ne.s32.totalorder %s87, %s88
    %p99 = scmp.eq.s32.totalorder %s13, 0
    %p100 = por %p98, %p99
    %p101 = scmp.ne.s32.totalorder %s87, %s88
    %p102 = scmp.eq.s32.totalorder %s14, 1
    %p103 = por %p101, %p102
    %p105 = scmp.ne.s32.totalorder %s88, %s104
    %p106 = scmp.eq.s32.totalorder %s14, 0
    %p107 = por %p105, %p106
    %p108 = scmp.le.s32.totalorder 1, %s8
    %p109 = scmp.lt.s32.totalorder %s8, 3
    %p110 = pnand %p108, %p109
    %p111 = pneg %p110
    // Predicated region
    $region9: #{tpu_custom_call.1} parent=5 // pred_check
      _
    $region10: #{tpu_custom_call.1} parent=5 // pred_check_branch
      %113 = sbr.rel (%p110) target = $region12
    $region11: #{tpu_custom_call.1} parent=5 // pred_region
      %s114 = ssub.s32 %s8, 1
    $region12: #{tpu_custom_call.1} parent=5 // pred_fallthru
      _
    %p115 = scmp.lt.s32.totalorder %s8, 2
    // Predicated region
    $region13: #{tpu_custom_call.1} parent=5 // pred_check
      %p116 = pneg %p115
    $region14: #{tpu_custom_call.1} parent=5 // pred_check_branch
      %118 = sbr.rel (%p116) target = $region16
    $region15: #{tpu_custom_call.1} parent=5 // pred_region
      // Predicated region
      $region17: #{tpu_custom_call.1} parent=15 // pred_check
        %p119 = pneg %p40
      $region18: #{tpu_custom_call.1} parent=15 // pred_check_branch
        %121 = sbr.rel (%p119) target = $region20
      $region19: #{tpu_custom_call.1} parent=15 // pred_region
        %p122 = scmp.lt.s32.totalorder %s15, 1
        %s123 = scalar_select %p122, %s15, 1
        %s124 = smul.addr %s123, 2
        %s125 = smul.addr %s124, 8
        %s126 = scalar_lea.vmem %s0, %s125
      $region20: #{tpu_custom_call.1} parent=15 // pred_fallthru
        _
      // Predicated region
      $region21: #{tpu_custom_call.1} parent=15 // pred_check
        %p127 = pneg %p66
      $region22: #{tpu_custom_call.1} parent=15 // pred_check_branch
        %129 = sbr.rel (%p127) target = $region24
      $region23: #{tpu_custom_call.1} parent=15 // pred_region
        %p130 = scmp.lt.s32.totalorder %s15, 1
        %s131 = scalar_select %p130, %s15, 1
        %s132 = scalar_lea.vmem %s1, %s131
      $region24: #{tpu_custom_call.1} parent=15 // pred_fallthru
        _
    $region16: #{tpu_custom_call.1} parent=5 // pred_fallthru
      _
    %p133 = scmp.le.s32.totalorder 1, %s8
    %p134 = scmp.lt.s32.totalorder %s8, 3
    %p135 = pnand %p133, %p134
    %p136 = pneg %p135
    // Predicated region
    $region25: #{tpu_custom_call.1} parent=5 // pred_check
      _
    $region26: #{tpu_custom_call.1} parent=5 // pred_check_branch
      %138 = sbr.rel (%p135) target = $region28
    $region27: #{tpu_custom_call.1} parent=5 // pred_region
      %s139 = ssub.s32 %s8, 1
      %p140 = scmp.lt.s32.totalorder %s17, 1
      %s141 = scalar_select %p140, %s17, 1
      %s142 = smul.addr %s141, 2
      %s143 = smul.addr %s142, 8
      %s144 = scalar_lea.vmem %s0, %s143
      %p145 = pneg %p46
      %p146 = pneg %p43
      %p147 = scmp.lt.s32.totalorder %s17, 1
      %s148 = scalar_select %p147, %s17, 1
      %s149 = scalar_lea.vmem %s1, %s148
      %p150 = pneg %p72
      %p151 = pneg %p69
      %p152 = pneg %p100
      %p153 = pneg %p97
      %s154 = smul.u32 2, %s18
      %p155 = scmp.lt.s32.totalorder %s17, 1
      %s156 = scalar_select %p155, %s17, 1
      %p157 = scmp.lt.s32.totalorder %s154, 1
      %s158 = scalar_select %p157, %s154, 1
      %s159 = smul.addr %s156, 2
      %s160 = sadd.s32 %s158, %s159
      %s161 = smul.addr %s160, 8
      %s162 = scalar_lea.vmem %s2, %s161
      %p163 = scmp.lt.s32.totalorder %s17, 1
      %s164 = scalar_select %p163, %s17, 1
      %s165 = smul.addr %s164, 2
      %s166 = smul.addr %s165, 8
      %s167 = scalar_lea.vmem %s0, %s166
      %p168 = scmp.lt.s32.totalorder %s17, 1
      %s169 = scalar_select %p168, %s17, 1
      %s170 = scalar_lea.vmem %s1, %s169
      %s171 = smul.u32 2, %s18
      %p172 = scmp.lt.s32.totalorder %s17, 1
      %s173 = scalar_select %p172, %s17, 1
      %p174 = scmp.lt.s32.totalorder %s171, 1
      %s175 = scalar_select %p174, %s171, 1
      %s176 = smul.addr %s173, 2
      %s177 = sadd.s32 %s175, %s176
      %s178 = smul.addr %s177, 8
      %s179 = scalar_lea.vmem %s2, %s178
      %s180 = smul.u32 2, %s18
      %s181 = smul.u32 %s18, 16
      %s182 = scalar_lea.vmem %s167, %s181
      %v183 = vld [vmem:[%s182] sm:$0xff]
      %v184 = vld [vmem:[%s182 + $0x8] sm:$0xff]
      %v185 = vld [vmem:[%s167] sm:$0xff]
      %v186 = vld [vmem:[%s167 + $0x8] sm:$0xff]
      %vm187 = vcmask 31744
      %v189 = vsel %vm187, %v183, 0
      %v192 = vsel %vm187, %v184, 0
      %v195 = vsel %vm187, %v185, 0
      %v198 = vsel %vm187, %v186, 0
      %200 = vmatpush.xpose.msra.mxu0 0.0
      %201 = vmatpush.xpose.msra.mxu0 0.0
      %202 = vmatpush.xpose.msra.mxu0 0.0
      %203 = vmatpush.xpose.msra.mxu0 0.0
      %204 = vmatpush.xpose.msra.mxu0 0.0
      %205 = vmatpush.xpose.msra.mxu0 0.0
      %206 = vmatpush.xpose.msra.mxu0 0.0
      %207 = vmatpush.xpose.msra.mxu0 0.0
      %208 = vmatpush.xpose.msra.mxu0 0.0
      %209 = vmatpush.xpose.msra.mxu0 0.0
      %210 = vmatpush.xpose.msra.mxu0 0.0
      %211 = vmatpush.xpose.msra.mxu0 0.0
      %212 = vmatpush.xpose.msra.mxu0 0.0
      %213 = vmatpush.xpose.msra.mxu0 0.0
      %214 = vmatpush.xpose.msra.mxu0 %v198
      %215 = vmatpush.xpose.msra.mxu0 %v195
      %216 = vmatmul.f32.gmra.mxu0 %v189
      %v217 = vpop.f32.mrf.mxu0
      %v218 = vadd.f32 0.0, %v217
      %219 = vmatmul.f32.gmra.mxu0 %v192
      %v220 = vpop.f32.mrf.mxu0
      %v221 = vadd.f32 0.0, %v220
      %222 = vdwg.mxu0
      %v223 = vld [vmem:[%s170] sm:$0x1]
      %v224 = vmul.f32 %v218, 2.0
      %v225 = vmul.f32 %v221, 2.0
      %v227 = vperm.slane %v223, 0
      %v229 = vsub.f32 %v227, %v224
      %v230 = vsub.f32 %v227, %v225
      %v231 = vlaneseq
      %v232 = vand.u32 %v231, 127
      %v233 = vlaneseq
      %v234 = vshrl.u32 %v233, 7
      %v235 = vadd.s32 %v234, 8
      %v236 = vstv %s181
      %v237 = vadd.s32 %v234, %v236
      %v238 = vadd.s32 %v235, %v236
      %vm239 = vcmp.eq.s32.totalorder %v232, %v237
      %vm240 = vcmp.eq.s32.totalorder %v232, %v238
      %v241 = vsel %vm239, inf, %v229
      %v242 = vsel %vm240, inf, %v230
      %v243 = vcvt.s32.f32 %v232
      %vm244 = vcmask 130048
      %v245 = vsel %vm244, %v241, inf
      %246 = vmin.xlane.f32.xlu0 %v245
      %v247 = vpop.xlane.xlu0 %246
      %v248 = vsel %vm244, %v242, inf
      %249 = vmin.xlane.f32.xlu0 %v248
      %v250 = vpop.xlane.xlu0 %249
      %vm251 = vcmp.le.f32.partialorder %v241, %v247
      %vm252 = vcmp.le.f32.partialorder %v242, %v250
      %v253 = vsel %vm251, %v243, 16.0
      %v254 = vsel %vm252, %v243, 16.0
      %v255 = vsel %vm244, %v253, inf
      %256 = vmin.xlane.f32.xlu0 %v255
      %v257 = vpop.xlane.xlu0 %256
      %v258 = vsel %vm244, %v254, inf
      %259 = vmin.xlane.f32.xlu0 %v258
      %v260 = vpop.xlane.xlu0 %259
      %v261 = vcvt.f32.s32.to.zero.pseudo %v257
      %v262 = vcvt.f32.s32.to.zero.pseudo %v260
      %vm263 = vcmask 7168
      %264 = vst.msk [vmem:[%s179] sm:$0xff] %vm263, %v261
      %265 = vst.msk [vmem:[%s179 + $0x8] sm:$0xff] %vm263, %v262
      %vm266 = vcmp.eq.s32.totalorder %v232, %v261
      %vm267 = vcmp.eq.s32.totalorder %v232, %v262
      %v268 = vsel %vm266, inf, %v241
      %v269 = vsel %vm267, inf, %v242
      %v270 = vsel %vm244, %v268, inf
      %271 = vmin.xlane.f32.xlu0 %v270
      %v272 = vpop.xlane.xlu0 %271
      %v273 = vsel %vm244, %v269, inf
      %274 = vmin.xlane.f32.xlu0 %v273
      %v275 = vpop.xlane.xlu0 %274
      %vm276 = vcmp.le.f32.partialorder %v268, %v272
      %vm277 = vcmp.le.f32.partialorder %v269, %v275
      %v278 = vsel %vm276, %v243, 16.0
      %v279 = vsel %vm277, %v243, 16.0
      %v280 = vsel %vm244, %v278, inf
      %281 = vmin.xlane.f32.xlu0 %v280
      %v282 = vpop.xlane.xlu0 %281
      %v283 = vsel %vm244, %v279, inf
      %284 = vmin.xlane.f32.xlu0 %v283
      %v285 = vpop.xlane.xlu0 %284
      %v286 = vcvt.f32.s32.to.zero.pseudo %v282
      %v287 = vcvt.f32.s32.to.zero.pseudo %v285
      %vm288 = vcmask 15368
      %289 = vst.msk [vmem:[%s179] sm:$0xff] %vm288, %v286
      %290 = vst.msk [vmem:[%s179 + $0x8] sm:$0xff] %vm288, %v287
      %vm291 = vcmp.eq.s32.totalorder %v232, %v286
      %vm292 = vcmp.eq.s32.totalorder %v232, %v287
      %v293 = vsel %vm291, inf, %v268
      %v294 = vsel %vm292, inf, %v269
      %v295 = vsel %vm244, %v293, inf
      %296 = vmin.xlane.f32.xlu0 %v295
      %v297 = vpop.xlane.xlu0 %296
      %v298 = vsel %vm244, %v294, inf
      %299 = vmin.xlane.f32.xlu0 %v298
      %v300 = vpop.xlane.xlu0 %299
      %vm301 = vcmp.le.f32.partialorder %v293, %v297
      %vm302 = vcmp.le.f32.partialorder %v294, %v300
      %v303 = vsel %vm301, %v243, 16.0
      %v304 = vsel %vm302, %v243, 16.0
      %v305 = vsel %vm244, %v303, inf
      %306 = vmin.xlane.f32.xlu0 %v305
      %v307 = vpop.xlane.xlu0 %306
      %v308 = vsel %vm244, %v304, inf
      %309 = vmin.xlane.f32.xlu0 %v308
      %v310 = vpop.xlane.xlu0 %309
      %v311 = vcvt.f32.s32.to.zero.pseudo %v307
      %v312 = vcvt.f32.s32.to.zero.pseudo %v310
      %vm313 = vcmask 23568
      %314 = vst.msk [vmem:[%s179] sm:$0xff] %vm313, %v311
      %315 = vst.msk [vmem:[%s179 + $0x8] sm:$0xff] %vm313, %v312
      %vm316 = vcmp.eq.s32.totalorder %v232, %v311
      %vm317 = vcmp.eq.s32.totalorder %v232, %v312
      %v318 = vsel %vm316, inf, %v293
      %v319 = vsel %vm317, inf, %v294
      %v320 = vsel %vm244, %v318, inf
      %321 = vmin.xlane.f32.xlu0 %v320
      %v322 = vpop.xlane.xlu0 %321
      %v323 = vsel %vm244, %v319, inf
      %324 = vmin.xlane.f32.xlu0 %v323
      %v325 = vpop.xlane.xlu0 %324
      %vm326 = vcmp.le.f32.partialorder %v318, %v322
      %vm327 = vcmp.le.f32.partialorder %v319, %v325
      %v328 = vsel %vm326, %v243, 16.0
      %v329 = vsel %vm327, %v243, 16.0
      %v330 = vsel %vm244, %v328, inf
      %331 = vmin.xlane.f32.xlu0 %v330
      %v332 = vpop.xlane.xlu0 %331
      %v333 = vsel %vm244, %v329, inf
      %334 = vmin.xlane.f32.xlu0 %v333
      %v335 = vpop.xlane.xlu0 %334
      %v336 = vcvt.f32.s32.to.zero.pseudo %v332
      %v337 = vcvt.f32.s32.to.zero.pseudo %v335
      %vm338 = vcmask 31768
      %339 = vst.msk [vmem:[%s179] sm:$0xff] %vm338, %v336
      %340 = vst.msk [vmem:[%s179 + $0x8] sm:$0xff] %vm338, %v337
      %s341 = smul.u32 2, %s18
      %p342 = scmp.lt.s32.totalorder %s17, 1
      %s343 = scalar_select %p342, %s17, 1
      %p344 = scmp.lt.s32.totalorder %s341, 1
      %s345 = scalar_select %p344, %s341, 1
      %s346 = smul.addr %s343, 2
      %s347 = sadd.s32 %s345, %s346
      %s348 = smul.addr %s347, 8
      %s349 = scalar_lea.vmem %s2, %s348
      // Predicated region
      $region29: #{tpu_custom_call.1} parent=27 // pred_check
        %p350 = pneg %p97
      $region30: #{tpu_custom_call.1} parent=27 // pred_check_branch
        %352 = sbr.rel (%p350) target = $region32
      $region31: #{tpu_custom_call.1} parent=27 // pred_region
        %s353 = smul.u32 2, %s18
      $region32: #{tpu_custom_call.1} parent=27 // pred_fallthru
        _
    $region28: #{tpu_custom_call.1} parent=5 // pred_fallthru
      _
    %p354 = scmp.le.s32.totalorder 2, %s8
    // Predicated region
    $region33: #{tpu_custom_call.1} parent=5 // pred_check
      %p355 = pneg %p354
    $region34: #{tpu_custom_call.1} parent=5 // pred_check_branch
      %357 = sbr.rel (%p355) target = $region36
    $region35: #{tpu_custom_call.1} parent=5 // pred_region
      %s358 = ssub.s32 %s8, 2
      // Predicated region
      $region37: #{tpu_custom_call.1} parent=35 // pred_check
        %p359 = pneg %p103
      $region38: #{tpu_custom_call.1} parent=35 // pred_check_branch
        %361 = sbr.rel (%p359) target = $region40
      $region39: #{tpu_custom_call.1} parent=35 // pred_region
        %s362 = smul.u32 2, %s20
        %p363 = scmp.lt.s32.totalorder %s19, 1
        %s364 = scalar_select %p363, %s19, 1
        %p365 = scmp.lt.s32.totalorder %s362, 1
        %s366 = scalar_select %p365, %s362, 1
        %s367 = smul.addr %s364, 2
        %s368 = sadd.s32 %s366, %s367
        %s369 = smul.addr %s368, 8
        %s370 = scalar_lea.vmem %s2, %s369
      $region40: #{tpu_custom_call.1} parent=35 // pred_fallthru
        _
    $region36: #{tpu_custom_call.1} parent=5 // pred_fallthru
      _
  $region6: #{tpu_custom_call.1} parent=0 // loop_footer
    %s12 = sadd.s32 1, %s8
  $region7: #{tpu_custom_call.1} parent=0 // loop_footer_branch
    %7 = sbr.rel target = $region3
  $region8: #{tpu_custom_call.1} parent=0 // loop_exit
    _

</llo_original>
